<compile_context>
chip_gen: v6e
topology: v6e:2x2x1
jax: 0.10.0
libtpu: 0.0.40
codegen_flags: <defaults>
</compile_context>

<pallas_src>
import functools

import jax
import jax.numpy as jnp
from jax.experimental import pallas as pl
from jax.experimental.pallas import tpu as pltpu


def _relation_fusing_kernel(*refs, num_relations, negative_slope):
    """One lane-dense node tile.

    refs layout:
      refs[0 .. R-1] : x_r tiles, each (Tn, H*Dn), native dtype
      refs[R]        : wbd, (R, H*Dn, H*Dn)  block-diag node projection (x.dtype)
      refs[R+1]      : ws,  (R, H*Dn, H*Dn)  fused score projection   (x.dtype)
      refs[R+2]      : out, (Tn, H*Dn)
    """
    R = num_relations
    x_refs = refs[:R]
    wbd_ref = refs[R]
    ws_ref = refs[R + 1]
    o_ref = refs[R + 2]

    # Per-relation attention scores straight from x with ONE matmul each:
    # score[r, n, e] = sum_k x_r[n, k] * ws[r, k, e]; the per-head score is
    # replicated across that head's Dn lanes, so everything stays lane-dense.
    scores = []
    for r in range(R):
        s_r = jnp.dot(x_refs[r][...], ws_ref[r],
                      preferred_element_type=jnp.float32)          # (Tn, HDn) f32
        scores.append(jnp.where(s_r >= 0, s_r, negative_slope * s_r))  # LeakyReLU

    # Numerically-stable softmax over the relation axis (exact reciprocal:
    # the approx EUP reciprocal previously cost ~2e-3 absolute error).
    m = scores[0]
    for r in range(1, R):
        m = jnp.maximum(m, scores[r])
    es = [jnp.exp(scores[r] - m) for r in range(R)]
    denom = es[0]
    for r in range(1, R):
        denom = denom + es[r]
    inv = 1.0 / denom                                              # (Tn, HDn)

    # Weighted fusion: feat_r is computed on the fly so only ~R+2 f32 slabs
    # of shape (Tn, HDn) are ever live (bounds VMEM scratch).
    # TODO(synk): for very large R switch to a running (online-softmax) fusion
    # so live state is O(Tn*HDn) regardless of R.
    acc = None
    for r in range(R):
        feat_r = jnp.dot(x_refs[r][...], wbd_ref[r],
                         preferred_element_type=jnp.float32)       # (Tn, HDn) f32
        term = feat_r * es[r]
        acc = term if acc is None else acc + term

    o_ref[...] = (acc * inv).astype(o_ref.dtype)


def _round_up(x, m):
    return ((x + m - 1) // m) * m


def _invariant_weight_spec(shape):
    """BlockSpec for a grid-invariant input: constant index_map, single buffer."""
    index_map = lambda i: (0,) * len(shape)
    try:
        # Double-buffering a block whose index never changes only burns VMEM.
        return pl.BlockSpec(shape, index_map, pipeline_mode=pl.Buffered(1))
    except (TypeError, AttributeError):
        # Graceful fallback on JAX versions without BlockSpec.pipeline_mode.
        return pl.BlockSpec(shape, index_map)


def relation_fusing(
    dst_node_features,
    dst_relation_embeddings,
    dst_node_feature_transformation_weight,
    dst_relation_embedding_transformation_weight,
    *,
    num_heads,
    node_hidden_dim,
    relation_hidden_dim,
    negative_slope=0.2,
    tile_n=None,
):
    if len(dst_node_features) == 1:
        # Matches the PyTorch module: a single relation is returned untouched.
        return dst_node_features[0]

    R = len(dst_node_features)
    H, Dn, Dr = num_heads, node_hidden_dim, relation_hidden_dim
    HDn = H * Dn

    # Node features stay as R separate (N, H*Dn) arrays -> no (R, N, HDn)
    # stack copy in HBM; each relation gets its own lane-dense BlockSpec.
    xs = [jnp.asarray(f).reshape(-1, HDn) for f in dst_node_features]
    N = xs[0].shape[0]
    x_dtype = xs[0].dtype
    xs = [x.astype(x_dtype) for x in xs]

    rel = jnp.stack(dst_relation_embeddings, 0).reshape(R, H, Dr)
    wn = jnp.stack(dst_node_feature_transformation_weight, 0).reshape(R, H, Dn, Dn)
    wr = jnp.stack(dst_relation_embedding_transformation_weight, 0).reshape(R, H, Dr, Dn)

    # ---- One-time weight preparation (wrapper side, tiny vs. the node loop) ----
    # Block-diagonal node projection: wbd[r, h*Dn+d, g*Dn+e] = wn[r,h,d,e]*[h==g],
    # cast to the input dtype so the main matmul stays on the fast MXU path.
    # TODO(synk): for Dn >= ~128-256 switch to per-head (R*H, Tn, Dn)@(Dn, Dn)
    # matmuls; the block-diagonal form wastes H x MACs once Dn alone fills the
    # MXU contraction depth (small Dn, as here, is the right regime for it).
    eye_h = jnp.eye(H, dtype=jnp.float32)
    wbd = jnp.einsum('rhde,hg->rhdge', wn.astype(jnp.float32), eye_h)
    wbd = wbd.reshape(R, HDn, HDn).astype(x_dtype)

    # Fused score projection: relation-embedding projection AND the per-head
    # block-of-ones reduction folded into one weight, so the kernel scores x
    # with a single input-dtype matmul:
    #   relp[r,h,:] = rel[r,h,:] @ wr[r,h]                         (R, H, Dn)
    #   sraw[r,h,d] = sum_e wn[r,h,d,e] * relp[r,h,e]              (R, H, Dn)
    #   ws[r, k, e] = sraw_flat[r, k] * [head(k) == head(e)]       (R, HDn, HDn)
    relp = jnp.einsum('rhc,rhcd->rhd', rel.astype(jnp.float32), wr.astype(jnp.float32))
    sraw = jnp.einsum('rhde,rhe->rhd', wn.astype(jnp.float32), relp).reshape(R, HDn)
    blk = jnp.kron(jnp.eye(H, dtype=jnp.float32), jnp.ones((Dn, Dn), jnp.float32))
    ws = (sraw[:, :, None] * blk[None]).astype(x_dtype)

    # ---- Tile selection (VMEM-budget aware, dtype-correct sublane rounding) ----
    itemsize = jnp.dtype(x_dtype).itemsize
    sublane = {4: 8, 2: 16, 1: 32}.get(itemsize, 8)
    if tile_n is None:
        budget = 20 * 1024 * 1024                      # safe across v5e/v6e/v7x
        per_row = (2 * R * HDn * itemsize              # R double-buffered x tiles
                   + 2 * HDn * itemsize                # double-buffered out tile
                   + (R + 4) * HDn * 4)                # f32 scores/exp + feat/acc temps
        tile_n = min(budget // max(per_row, 1), 512)
        # Keep >= 4 grid steps when N allows, so v7x's two TensorCores both
        # get work from the "parallel" node axis.
        if N > 4 * sublane:
            tile_n = min(tile_n, _round_up(pl.cdiv(N, 4), sublane))
    tile_n = int(max(sublane, min(int(tile_n), _round_up(N, sublane))))
    tile_n = _round_up(tile_n, sublane)
    grid = (pl.cdiv(N, tile_n),)

    # Explicit scoped-VMEM limit (tiles + single-buffered weights + headroom),
    # capped below v7x's 64 MiB physical VMEM.
    weights_bytes = 2 * R * HDn * HDn * itemsize
    tile_bytes = tile_n * ((2 * R + 2) * HDn * itemsize + (R + 4) * HDn * 4)
    vmem_limit = int(min(56 * 1024 * 1024,
                         max(32 * 1024 * 1024, 2 * (tile_bytes + weights_bytes))))

    kernel = functools.partial(_relation_fusing_kernel,
                               num_relations=R, negative_slope=negative_slope)

    x_spec = pl.BlockSpec((tile_n, HDn), lambda i: (i, 0))
    w_spec = _invariant_weight_spec((R, HDn, HDn))

    out = pl.pallas_call(
        kernel,
        out_shape=jax.ShapeDtypeStruct((N, HDn), x_dtype),
        grid_spec=pltpu.PrefetchScalarGridSpec(
            num_scalar_prefetch=0,
            grid=grid,
            in_specs=[x_spec] * R + [w_spec, w_spec],
            out_specs=pl.BlockSpec((tile_n, HDn), lambda i: (i, 0)),
        ),
        compiler_params=pltpu.CompilerParams(
            # Node-tile axis carries no accumulator -> shardable across the
            # two TensorCores on v7x; harmless on single-TC v5e/v6e.
            dimension_semantics=("parallel",),
            vmem_limit_bytes=vmem_limit,
        ),
    )(*xs, wbd, ws)

    # TODO(synk): dropout omitted (p=0.0 default / eval mode => identity).
    return out


def _reference(node_feats, rel_embs, node_w, rel_w, H, Dn, Dr, ns=0.2):
    """Pure-JAX mirror of the PyTorch forward, for verification."""
    R = len(node_feats)
    x = jnp.stack(node_feats, 0).reshape(R, -1, H, Dn)
    rel = jnp.stack(rel_embs, 0).reshape(R, H, Dr)
    wn = jnp.stack(node_w, 0).reshape(R, H, Dn, Dn)
    wr = jnp.stack(rel_w, 0).reshape(R, H, Dr, Dn)
    feat = jnp.einsum('abcd,acde->abce', x, wn)
    relp = jnp.einsum('abc,abcd->abd', rel, wr)
    s = jnp.sum(feat * relp[:, None, :, :], axis=-1, keepdims=True)
    s = jnp.where(s >= 0, s, ns * s)
    a = jax.nn.softmax(s, axis=0)
    out = jnp.sum(feat * a, axis=0)
    return out.reshape(-1, H * Dn)


if __name__ == "__main__":
    # Small deterministic example.
    R = 3            # number of relations
    N = 96           # number of destination nodes
    H = 4            # num_heads
    Dn = 16          # node_hidden_dim
    Dr = 8           # relation_hidden_dim

    key = jax.random.PRNGKey(0)
    keys = jax.random.split(key, 4 * R)

    node_feats = [jax.random.normal(keys[4 * r + 0], (N, H * Dn), jnp.float32) for r in range(R)]
    rel_embs = [jax.random.normal(keys[4 * r + 1], (H * Dr,), jnp.float32) for r in range(R)]
    node_w = [0.1 * jax.random.normal(keys[4 * r + 2], (H, Dn, Dn), jnp.float32) for r in range(R)]
    rel_w = [0.1 * jax.random.normal(keys[4 * r + 3], (H, Dr, Dn), jnp.float32) for r in range(R)]

    ref = _reference(node_feats, rel_embs, node_w, rel_w, H, Dn, Dr, ns=0.2)

    # 1) Explicit small tile -> multi-step grid.
    out = relation_fusing(
        node_feats, rel_embs, node_w, rel_w,
        num_heads=H, node_hidden_dim=Dn, relation_hidden_dim=Dr,
        negative_slope=0.2, tile_n=32,
    )
    out = jax.block_until_ready(out)
    assert out.shape == (N, H * Dn), out.shape
    assert jnp.allclose(out, ref, atol=1e-3, rtol=1e-3), float(jnp.max(jnp.abs(out - ref)))

    # 2) Auto (VMEM-budget aware) tile selection path.
    out2 = relation_fusing(
        node_feats, rel_embs, node_w, rel_w,
        num_heads=H, node_hidden_dim=Dn, relation_hidden_dim=Dr,
        negative_slope=0.2,
    )
    out2 = jax.block_until_ready(out2)
    assert out2.shape == (N, H * Dn), out2.shape
    assert jnp.allclose(out2, ref, atol=1e-3, rtol=1e-3), float(jnp.max(jnp.abs(out2 - ref)))

    print("KERNEL_OK")
</pallas_src>

<mosaic_0001>
module attributes {stable_mosaic.version = 11 : i64} {
  func.func @_relation_fusing_kernel(%arg0: i32, %arg1: memref<32x64xf32, #tpu.memory_space<vmem>>, %arg2: memref<32x64xf32, #tpu.memory_space<vmem>>, %arg3: memref<32x64xf32, #tpu.memory_space<vmem>>, %arg4: memref<3x64x64xf32, #tpu.memory_space<vmem>>, %arg5: memref<3x64x64xf32, #tpu.memory_space<vmem>>, %arg6: memref<32x64xf32, #tpu.memory_space<vmem>>) attributes {dimension_semantics = [#tpu.dimension_semantics<parallel>], iteration_bounds = array<i64: 3>, scalar_prefetch = 0 : i64, scratch_operands = 0 : i64, tpu.core_type = #tpu.core_type<tc>, window_params = [{transform_indices = @transform_0, window_bounds = array<i64: 32, 64>}, {transform_indices = @transform_1, window_bounds = array<i64: 32, 64>}, {transform_indices = @transform_2, window_bounds = array<i64: 32, 64>}, {pipeline_mode = #tpu.pipeline_mode<synchronous>, transform_indices = @transform_3, window_bounds = array<i64: 3, 64, 64>}, {pipeline_mode = #tpu.pipeline_mode<synchronous>, transform_indices = @transform_4, window_bounds = array<i64: 3, 64, 64>}, {transform_indices = @transform_5, window_bounds = array<i64: 32, 64>}]} {
    %c0 = arith.constant 0 : index
    %c0_0 = arith.constant 0 : index
    %0 = vector.load %arg1[%c0, %c0_0] : memref<32x64xf32, #tpu.memory_space<vmem>>, vector<32x64xf32>
    %c0_1 = arith.constant 0 : index
    %c0_2 = arith.constant 0 : index
    %c0_3 = arith.constant 0 : index
    %1 = vector.load %arg5[%c0_1, %c0_2, %c0_3] : memref<3x64x64xf32, #tpu.memory_space<vmem>>, vector<1x64x64xf32>
    %2 = vector.shape_cast %1 : vector<1x64x64xf32> to vector<64x64xf32>
    %cst = arith.constant dense<0.000000e+00> : vector<32x64xf32>
    %3 = tpu.matmul %0, %2, %cst {dimension_numbers = #tpu.dot_dimension_numbers<[1], [0], [0], [1], [0, 0, 1, 1], [], []>} : vector<32x64xf32>, vector<64x64xf32>, vector<32x64xf32> -> vector<32x64xf32>
    %cst_4 = arith.constant 0.000000e+00 : f32
    %4 = vector.broadcast %cst_4 : f32 to vector<32x64xf32>
    %5 = arith.cmpf oge, %3, %4 : vector<32x64xf32>
    %cst_5 = arith.constant 2.000000e-01 : f32
    %6 = vector.broadcast %cst_5 : f32 to vector<32x64xf32>
    %7 = arith.mulf %6, %3 : vector<32x64xf32>
    %8 = arith.select %5, %3, %7 : vector<32x64xi1>, vector<32x64xf32>
    %c0_6 = arith.constant 0 : index
    %c0_7 = arith.constant 0 : index
    %9 = vector.load %arg2[%c0_6, %c0_7] : memref<32x64xf32, #tpu.memory_space<vmem>>, vector<32x64xf32>
    %c1 = arith.constant 1 : index
    %c0_8 = arith.constant 0 : index
    %c0_9 = arith.constant 0 : index
    %10 = vector.load %arg5[%c1, %c0_8, %c0_9] : memref<3x64x64xf32, #tpu.memory_space<vmem>>, vector<1x64x64xf32>
    %11 = vector.shape_cast %10 : vector<1x64x64xf32> to vector<64x64xf32>
    %cst_10 = arith.constant dense<0.000000e+00> : vector<32x64xf32>
    %12 = tpu.matmul %9, %11, %cst_10 {dimension_numbers = #tpu.dot_dimension_numbers<[1], [0], [0], [1], [0, 0, 1, 1], [], []>} : vector<32x64xf32>, vector<64x64xf32>, vector<32x64xf32> -> vector<32x64xf32>
    %cst_11 = arith.constant 0.000000e+00 : f32
    %13 = vector.broadcast %cst_11 : f32 to vector<32x64xf32>
    %14 = arith.cmpf oge, %12, %13 : vector<32x64xf32>
    %cst_12 = arith.constant 2.000000e-01 : f32
    %15 = vector.broadcast %cst_12 : f32 to vector<32x64xf32>
    %16 = arith.mulf %15, %12 : vector<32x64xf32>
    %17 = arith.select %14, %12, %16 : vector<32x64xi1>, vector<32x64xf32>
    %c0_13 = arith.constant 0 : index
    %c0_14 = arith.constant 0 : index
    %18 = vector.load %arg3[%c0_13, %c0_14] : memref<32x64xf32, #tpu.memory_space<vmem>>, vector<32x64xf32>
    %c2 = arith.constant 2 : index
    %c0_15 = arith.constant 0 : index
    %c0_16 = arith.constant 0 : index
    %19 = vector.load %arg5[%c2, %c0_15, %c0_16] : memref<3x64x64xf32, #tpu.memory_space<vmem>>, vector<1x64x64xf32>
    %20 = vector.shape_cast %19 : vector<1x64x64xf32> to vector<64x64xf32>
    %cst_17 = arith.constant dense<0.000000e+00> : vector<32x64xf32>
    %21 = tpu.matmul %18, %20, %cst_17 {dimension_numbers = #tpu.dot_dimension_numbers<[1], [0], [0], [1], [0, 0, 1, 1], [], []>} : vector<32x64xf32>, vector<64x64xf32>, vector<32x64xf32> -> vector<32x64xf32>
    %cst_18 = arith.constant 0.000000e+00 : f32
    %22 = vector.broadcast %cst_18 : f32 to vector<32x64xf32>
    %23 = arith.cmpf oge, %21, %22 : vector<32x64xf32>
    %cst_19 = arith.constant 2.000000e-01 : f32
    %24 = vector.broadcast %cst_19 : f32 to vector<32x64xf32>
    %25 = arith.mulf %24, %21 : vector<32x64xf32>
    %26 = arith.select %23, %21, %25 : vector<32x64xi1>, vector<32x64xf32>
    %27 = arith.maximumf %8, %17 : vector<32x64xf32>
    %28 = arith.maximumf %27, %26 : vector<32x64xf32>
    %29 = arith.subf %8, %28 : vector<32x64xf32>
    %30 = math.exp %29 : vector<32x64xf32>
    %31 = arith.subf %17, %28 : vector<32x64xf32>
    %32 = math.exp %31 : vector<32x64xf32>
    %33 = arith.subf %26, %28 : vector<32x64xf32>
    %34 = math.exp %33 : vector<32x64xf32>
    %35 = arith.addf %30, %32 : vector<32x64xf32>
    %36 = arith.addf %35, %34 : vector<32x64xf32>
    %cst_20 = arith.constant 1.000000e+00 : f32
    %37 = vector.broadcast %cst_20 : f32 to vector<32x64xf32>
    %38 = arith.divf %37, %36 : vector<32x64xf32>
    %c0_21 = arith.constant 0 : index
    %c0_22 = arith.constant 0 : index
    %39 = vector.load %arg1[%c0_21, %c0_22] : memref<32x64xf32, #tpu.memory_space<vmem>>, vector<32x64xf32>
    %c0_23 = arith.constant 0 : index
    %c0_24 = arith.constant 0 : index
    %c0_25 = arith.constant 0 : index
    %40 = vector.load %arg4[%c0_23, %c0_24, %c0_25] : memref<3x64x64xf32, #tpu.memory_space<vmem>>, vector<1x64x64xf32>
    %41 = vector.shape_cast %40 : vector<1x64x64xf32> to vector<64x64xf32>
    %cst_26 = arith.constant dense<0.000000e+00> : vector<32x64xf32>
    %42 = tpu.matmul %39, %41, %cst_26 {dimension_numbers = #tpu.dot_dimension_numbers<[1], [0], [0], [1], [0, 0, 1, 1], [], []>} : vector<32x64xf32>, vector<64x64xf32>, vector<32x64xf32> -> vector<32x64xf32>
    %43 = arith.mulf %42, %30 : vector<32x64xf32>
    %c0_27 = arith.constant 0 : index
    %c0_28 = arith.constant 0 : index
    %44 = vector.load %arg2[%c0_27, %c0_28] : memref<32x64xf32, #tpu.memory_space<vmem>>, vector<32x64xf32>
    %c1_29 = arith.constant 1 : index
    %c0_30 = arith.constant 0 : index
    %c0_31 = arith.constant 0 : index
    %45 = vector.load %arg4[%c1_29, %c0_30, %c0_31] : memref<3x64x64xf32, #tpu.memory_space<vmem>>, vector<1x64x64xf32>
    %46 = vector.shape_cast %45 : vector<1x64x64xf32> to vector<64x64xf32>
    %cst_32 = arith.constant dense<0.000000e+00> : vector<32x64xf32>
    %47 = tpu.matmul %44, %46, %cst_32 {dimension_numbers = #tpu.dot_dimension_numbers<[1], [0], [0], [1], [0, 0, 1, 1], [], []>} : vector<32x64xf32>, vector<64x64xf32>, vector<32x64xf32> -> vector<32x64xf32>
    %48 = arith.mulf %47, %32 : vector<32x64xf32>
    %49 = arith.addf %43, %48 : vector<32x64xf32>
    %c0_33 = arith.constant 0 : index
    %c0_34 = arith.constant 0 : index
    %50 = vector.load %arg3[%c0_33, %c0_34] : memref<32x64xf32, #tpu.memory_space<vmem>>, vector<32x64xf32>
    %c2_35 = arith.constant 2 : index
    %c0_36 = arith.constant 0 : index
    %c0_37 = arith.constant 0 : index
    %51 = vector.load %arg4[%c2_35, %c0_36, %c0_37] : memref<3x64x64xf32, #tpu.memory_space<vmem>>, vector<1x64x64xf32>
    %52 = vector.shape_cast %51 : vector<1x64x64xf32> to vector<64x64xf32>
    %cst_38 = arith.constant dense<0.000000e+00> : vector<32x64xf32>
    %53 = tpu.matmul %50, %52, %cst_38 {dimension_numbers = #tpu.dot_dimension_numbers<[1], [0], [0], [1], [0, 0, 1, 1], [], []>} : vector<32x64xf32>, vector<64x64xf32>, vector<32x64xf32> -> vector<32x64xf32>
    %54 = arith.mulf %53, %34 : vector<32x64xf32>
    %55 = arith.addf %49, %54 : vector<32x64xf32>
    %56 = arith.mulf %55, %38 : vector<32x64xf32>
    %c0_39 = arith.constant 0 : index
    %c0_40 = arith.constant 0 : index
    %57 = vector.load %arg6[%c0_39, %c0_40] : memref<32x64xf32, #tpu.memory_space<vmem>>, vector<32x64xf32>
    tpu.vector_store %arg6[%c0_39, %c0_40], %56 {strides = array<i32>} : memref<32x64xf32, #tpu.memory_space<vmem>>, vector<32x64xf32>,
    return
  }
  func.func @transform_0(%arg0: i32) -> (i32, i32) {
    %c0_i32 = arith.constant 0 : i32
    %c0_i32_0 = arith.constant 0 : i32
    return %arg0, %c0_i32 : i32, i32
  }
  func.func @transform_1(%arg0: i32) -> (i32, i32) {
    %c0_i32 = arith.constant 0 : i32
    %c0_i32_0 = arith.constant 0 : i32
    return %arg0, %c0_i32 : i32, i32
  }
  func.func @transform_2(%arg0: i32) -> (i32, i32) {
    %c0_i32 = arith.constant 0 : i32
    %c0_i32_0 = arith.constant 0 : i32
    return %arg0, %c0_i32 : i32, i32
  }
  func.func @transform_3(%arg0: i32) -> (i32, i32, i32) {
    %c0_i32 = arith.constant 0 : i32
    %c0_i32_0 = arith.constant 0 : i32
    %c0_i32_1 = arith.constant 0 : i32
    %c0_i32_2 = arith.constant 0 : i32
    return %c0_i32, %c0_i32_0, %c0_i32_1 : i32, i32, i32
  }
  func.func @transform_4(%arg0: i32) -> (i32, i32, i32) {
    %c0_i32 = arith.constant 0 : i32
    %c0_i32_0 = arith.constant 0 : i32
    %c0_i32_1 = arith.constant 0 : i32
    %c0_i32_2 = arith.constant 0 : i32
    return %c0_i32, %c0_i32_0, %c0_i32_1 : i32, i32, i32
  }
  func.func @transform_5(%arg0: i32) -> (i32, i32) {
    %c0_i32 = arith.constant 0 : i32
    %c0_i32_0 = arith.constant 0 : i32
    return %arg0, %c0_i32 : i32, i32
  }
}

</mosaic_0001>

<llo_original>
// kernel: tpu_custom_call.1
$region0: #{tpu_custom_call.1}
  #allocation0 [shape = 'u32[]', space=smem, size = 0x4, offset = 0x4, fixed_abs, tag = 'smem constant byte address 0x4 - core index']
  #allocation1 [shape = 'u32[144,128]{1,0:T(1,128)}', space=vmem, size = 0x12000, scoped, tag = 'internal scratch']
  %s0 = inlined_call_operand.vmem [shape: f32[96,64], index: 0, kind: input, shape index: {}]
  %s1 = inlined_call_operand.vmem [shape: f32[96,64], index: 1, kind: input, shape index: {}]
  %s2 = inlined_call_operand.vmem [shape: f32[96,64], index: 2, kind: input, shape index: {}]
  %s3 = inlined_call_operand.vmem [shape: f32[3,64,64], index: 3, kind: input, shape index: {}]
  %s4 = inlined_call_operand.vmem [shape: f32[3,64,64], index: 4, kind: input, shape index: {}]
  %s5 = inlined_call_operand.vmem [shape: f32[96,64], index: 5, kind: output, shape index: {}]
  %s6 = sld [smem:[#allocation0]]
  $region53: #{tpu_custom_call.1} parent=0
    _
  %s8 = ssub.s32 1, %s6
  %s9 = scalar_select 0, %s8, %s6
  loop: start=0, step=1, limit=5
  $region2: #{tpu_custom_call.1} parent=0 // loop_pre_header
    _
  $region3: #{tpu_custom_call.1} parent=0 // loop_header
    %s11 = sphi 0, %s15
    %p12 = scmp.ge.s32.totalorder %s11, 5
    %s21 = sphi 0, %s23
    %s24 = sphi 0, %s21
    %s25 = sphi 0, %s24
    %s41 = sphi 0, %s25
    %s47 = sphi 0, %s49
    %s50 = sphi 0, %s47
    %s51 = sphi 0, %s50
    %s67 = sphi 0, %s51
    %s73 = sphi 0, %s75
    %s76 = sphi 0, %s73
    %s77 = sphi 0, %s76
    %s93 = sphi 0, %s77
    %s97 = sphi 0, %s97
    %s99 = sphi 0, %s97
    %s100 = sphi 0, %s99
    %s114 = sphi 0, %s100
    %s118 = sphi 0, %s118
    %s120 = sphi 0, %s118
    %s121 = sphi 0, %s120
    %s135 = sphi 0, %s121
    %s141 = sphi 0, %s143
    %s144 = sphi 0, %s141
    %s145 = sphi 0, %s144
    %s161 = sphi 0, %s145
  $region4: #{tpu_custom_call.1} parent=0 // loop_header_branch
    %14 = sbr.rel (%p12) target = $region8
  $region5: #{tpu_custom_call.1} parent=0 // loop_body
    %s16 = ssub.s32 %s11, 1
    %s17 = ssub.s32 %s11, 2
    %s18 = sadd.s32 %s11, 1
    %s19 = ssub.s32 %s11, %s18
    %p20 = scmp.eq.s32.totalorder %s19, 0
    %s22 = sadd.s32 %s21, 1
    %s23 = scalar_select %p20, %s21, %s22
    %p26 = pneg %p20
    %p27 = scmp.eq.s32.totalorder %s11, 2
    %p28 = por %p26, %p27
    %p29 = scmp.ne.s32.totalorder %s21, %s24
    %p30 = scmp.eq.s32.totalorder %s11, 0
    %p31 = por %p29, %p30
    %p32 = scmp.ne.s32.totalorder %s21, %s24
    %p33 = scmp.eq.s32.totalorder %s16, 2
    %p34 = por %p32, %p33
    %p35 = scmp.ne.s32.totalorder %s24, %s25
    %p36 = scmp.eq.s32.totalorder %s16, 0
    %p37 = por %p35, %p36
    %p38 = scmp.ne.s32.totalorder %s24, %s25
    %p39 = scmp.eq.s32.totalorder %s17, 2
    %p40 = por %p38, %p39
    %p42 = scmp.ne.s32.totalorder %s25, %s41
    %p43 = scmp.eq.s32.totalorder %s17, 0
    %p44 = por %p42, %p43
    %s45 = ssub.s32 %s11, %s18
    %p46 = scmp.eq.s32.totalorder %s45, 0
    %s48 = sadd.s32 %s47, 1
    %s49 = scalar_select %p46, %s47, %s48
    %p52 = pneg %p46
    %p53 = scmp.eq.s32.totalorder %s11, 2
    %p54 = por %p52, %p53
    %p55 = scmp.ne.s32.totalorder %s47, %s50
    %p56 = scmp.eq.s32.totalorder %s11, 0
    %p57 = por %p55, %p56
    %p58 = scmp.ne.s32.totalorder %s47, %s50
    %p59 = scmp.eq.s32.totalorder %s16, 2
    %p60 = por %p58, %p59
    %p61 = scmp.ne.s32.totalorder %s50, %s51
    %p62 = scmp.eq.s32.totalorder %s16, 0
    %p63 = por %p61, %p62
    %p64 = scmp.ne.s32.totalorder %s50, %s51
    %p65 = scmp.eq.s32.totalorder %s17, 2
    %p66 = por %p64, %p65
    %p68 = scmp.ne.s32.totalorder %s51, %s67
    %p69 = scmp.eq.s32.totalorder %s17, 0
    %p70 = por %p68, %p69
    %s71 = ssub.s32 %s11, %s18
    %p72 = scmp.eq.s32.totalorder %s71, 0
    %s74 = sadd.s32 %s73, 1
    %s75 = scalar_select %p72, %s73, %s74
    %p78 = pneg %p72
    %p79 = scmp.eq.s32.totalorder %s11, 2
    %p80 = por %p78, %p79
    %p81 = scmp.ne.s32.totalorder %s73, %s76
    %p82 = scmp.eq.s32.totalorder %s11, 0
    %p83 = por %p81, %p82
    %p84 = scmp.ne.s32.totalorder %s73, %s76
    %p85 = scmp.eq.s32.totalorder %s16, 2
    %p86 = por %p84, %p85
    %p87 = scmp.ne.s32.totalorder %s76, %s77
    %p88 = scmp.eq.s32.totalorder %s16, 0
    %p89 = por %p87, %p88
    %p90 = scmp.ne.s32.totalorder %s76, %s77
    %p91 = scmp.eq.s32.totalorder %s17, 2
    %p92 = por %p90, %p91
    %p94 = scmp.ne.s32.totalorder %s77, %s93
    %p95 = scmp.eq.s32.totalorder %s17, 0
    %p96 = por %p94, %p95
    %s98 = sadd.s32 %s97, 1
    %p101 = scmp.eq.s32.totalorder %s11, 2
    %p102 = scmp.ne.s32.totalorder %s97, %s99
    %p103 = scmp.eq.s32.totalorder %s11, 0
    %p104 = por %p102, %p103
    %p105 = scmp.ne.s32.totalorder %s97, %s99
    %p106 = scmp.eq.s32.totalorder %s16, 2
    %p107 = por %p105, %p106
    %p108 = scmp.ne.s32.totalorder %s99, %s100
    %p109 = scmp.eq.s32.totalorder %s16, 0
    %p110 = por %p108, %p109
    %p111 = scmp.ne.s32.totalorder %s99, %s100
    %p112 = scmp.eq.s32.totalorder %s17, 2
    %p113 = por %p111, %p112
    %p115 = scmp.ne.s32.totalorder %s100, %s114
    %p116 = scmp.eq.s32.totalorder %s17, 0
    %p117 = por %p115, %p116
    %s119 = sadd.s32 %s118, 1
    %p122 = scmp.eq.s32.totalorder %s11, 2
    %p123 = scmp.ne.s32.totalorder %s118, %s120
    %p124 = scmp.eq.s32.totalorder %s11, 0
    %p125 = por %p123, %p124
    %p126 = scmp.ne.s32.totalorder %s118, %s120
    %p127 = scmp.eq.s32.totalorder %s16, 2
    %p128 = por %p126, %p127
    %p129 = scmp.ne.s32.totalorder %s120, %s121
    %p130 = scmp.eq.s32.totalorder %s16, 0
    %p131 = por %p129, %p130
    %p132 = scmp.ne.s32.totalorder %s120, %s121
    %p133 = scmp.eq.s32.totalorder %s17, 2
    %p134 = por %p132, %p133
    %p136 = scmp.ne.s32.totalorder %s121, %s135
    %p137 = scmp.eq.s32.totalorder %s17, 0
    %p138 = por %p136, %p137
    %s139 = ssub.s32 %s11, %s18
    %p140 = scmp.eq.s32.totalorder %s139, 0
    %s142 = sadd.s32 %s141, 1
    %s143 = scalar_select %p140, %s141, %s142
    %p146 = pneg %p140
    %p147 = scmp.eq.s32.totalorder %s11, 2
    %p148 = por %p146, %p147
    %p149 = scmp.ne.s32.totalorder %s141, %s144
    %p150 = scmp.eq.s32.totalorder %s11, 0
    %p151 = por %p149, %p150
    %p152 = scmp.ne.s32.totalorder %s141, %s144
    %p153 = scmp.eq.s32.totalorder %s16, 2
    %p154 = por %p152, %p153
    %p155 = scmp.ne.s32.totalorder %s144, %s145
    %p156 = scmp.eq.s32.totalorder %s16, 0
    %p157 = por %p155, %p156
    %p158 = scmp.ne.s32.totalorder %s144, %s145
    %p159 = scmp.eq.s32.totalorder %s17, 2
    %p160 = por %p158, %p159
    %p162 = scmp.ne.s32.totalorder %s145, %s161
    %p163 = scmp.eq.s32.totalorder %s17, 0
    %p164 = por %p162, %p163
    %p165 = scmp.le.s32.totalorder 1, %s11
    %p166 = scmp.lt.s32.totalorder %s11, 4
    %p167 = pnand %p165, %p166
    %p168 = pneg %p167
    // Predicated region
    $region9: #{tpu_custom_call.1} parent=5 // pred_check
      _
    $region10: #{tpu_custom_call.1} parent=5 // pred_check_branch
      %170 = sbr.rel (%p167) target = $region12
    $region11: #{tpu_custom_call.1} parent=5 // pred_region
      %s171 = ssub.s32 %s11, 1
      // Predicated region
      $region13: #{tpu_custom_call.1} parent=11 // pred_check
        %p172 = pneg %p110
      $region14: #{tpu_custom_call.1} parent=11 // pred_check_branch
        %174 = sbr.rel (%p172) target = $region16
      $region15: #{tpu_custom_call.1} parent=11 // pred_region
        _
      $region16: #{tpu_custom_call.1} parent=11 // pred_fallthru
        _
      // Predicated region
      $region17: #{tpu_custom_call.1} parent=11 // pred_check
        %p175 = pneg %p131
      $region18: #{tpu_custom_call.1} parent=11 // pred_check_branch
        %177 = sbr.rel (%p175) target = $region20
      $region19: #{tpu_custom_call.1} parent=11 // pred_region
        _
      $region20: #{tpu_custom_call.1} parent=11 // pred_fallthru
        _
    $region12: #{tpu_custom_call.1} parent=5 // pred_fallthru
      _
    %p178 = scmp.lt.s32.totalorder %s11, 3
    // Predicated region
    $region21: #{tpu_custom_call.1} parent=5 // pred_check
      %p179 = pneg %p178
    $region22: #{tpu_custom_call.1} parent=5 // pred_check_branch
      %181 = sbr.rel (%p179) target = $region24
    $region23: #{tpu_custom_call.1} parent=5 // pred_region
      // Predicated region
      $region25: #{tpu_custom_call.1} parent=23 // pred_check
        %p182 = pneg %p31
      $region26: #{tpu_custom_call.1} parent=23 // pred_check_branch
        %184 = sbr.rel (%p182) target = $region28
      $region27: #{tpu_custom_call.1} parent=23 // pred_region
        %s185 = smul.u32 4, %s11
        %p186 = scmp.lt.s32.totalorder %s185, 11
        %s187 = scalar_select %p186, %s185, 11
        %s188 = smul.addr %s187, 8
        %s189 = scalar_lea.vmem %s0, %s188
        %s190 = smul.u32 4, %s11
      $region28: #{tpu_custom_call.1} parent=23 // pred_fallthru
        _
      // Predicated region
      $region29: #{tpu_custom_call.1} parent=23 // pred_check
        %p191 = pneg %p57
      $region30: #{tpu_custom_call.1} parent=23 // pred_check_branch
        %193 = sbr.rel (%p191) target = $region32
      $region31: #{tpu_custom_call.1} parent=23 // pred_region
        %s194 = smul.u32 4, %s11
        %p195 = scmp.lt.s32.totalorder %s194, 11
        %s196 = scalar_select %p195, %s194, 11
        %s197 = smul.addr %s196, 8
        %s198 = scalar_lea.vmem %s1, %s197
        %s199 = smul.u32 4, %s11
      $region32: #{tpu_custom_call.1} parent=23 // pred_fallthru
        _
      // Predicated region
      $region33: #{tpu_custom_call.1} parent=23 // pred_check
        %p200 = pneg %p83
      $region34: #{tpu_custom_call.1} parent=23 // pred_check_branch
        %202 = sbr.rel (%p200) target = $region36
      $region35: #{tpu_custom_call.1} parent=23 // pred_region
        %s203 = smul.u32 4, %s11
        %p204 = scmp.lt.s32.totalorder %s203, 11
        %s205 = scalar_select %p204, %s203, 11
        %s206 = smul.addr %s205, 8
        %s207 = scalar_lea.vmem %s2, %s206
        %s208 = smul.u32 4, %s11
      $region36: #{tpu_custom_call.1} parent=23 // pred_fallthru
        _
    $region24: #{tpu_custom_call.1} parent=5 // pred_fallthru
      _
    %p209 = scmp.le.s32.totalorder 1, %s11
    %p210 = scmp.lt.s32.totalorder %s11, 4
    %p211 = pnand %p209, %p210
    %p212 = pneg %p211
    // Predicated region
    $region37: #{tpu_custom_call.1} parent=5 // pred_check
      _
    $region38: #{tpu_custom_call.1} parent=5 // pred_check_branch
      %214 = sbr.rel (%p211) target = $region40
    $region39: #{tpu_custom_call.1} parent=5 // pred_region
      %s215 = ssub.s32 %s11, 1
      %s216 = smul.u32 4, %s16
      %p217 = scmp.lt.s32.totalorder %s216, 11
      %s218 = scalar_select %p217, %s216, 11
      %s219 = smul.addr %s218, 8
      %s220 = scalar_lea.vmem %s0, %s219
      %p221 = pneg %p37
      %p222 = pneg %p34
      %s223 = smul.u32 4, %s16
      %p224 = scmp.lt.s32.totalorder %s223, 11
      %s225 = scalar_select %p224, %s223, 11
      %s226 = smul.addr %s225, 8
      %s227 = scalar_lea.vmem %s1, %s226
      %p228 = pneg %p63
      %p229 = pneg %p60
      %s230 = smul.u32 4, %s16
      %p231 = scmp.lt.s32.totalorder %s230, 11
      %s232 = scalar_select %p231, %s230, 11
      %s233 = smul.addr %s232, 8
      %s234 = scalar_lea.vmem %s2, %s233
      %p235 = pneg %p89
      %p236 = pneg %p86
      %p237 = pneg %p110
      %p238 = pneg %p107
      %p239 = pneg %p131
      %p240 = pneg %p128
      %p241 = pneg %p157
      %p242 = pneg %p154
      %s243 = smul.u32 4, %s16
      %p244 = scmp.lt.s32.totalorder %s243, 11
      %s245 = scalar_select %p244, %s243, 11
      %s246 = smul.addr %s245, 8
      %s247 = scalar_lea.vmem %s5, %s246
      %s248 = smul.u32 4, %s16
      %p249 = scmp.lt.s32.totalorder %s248, 11
      %s250 = scalar_select %p249, %s248, 11
      %s251 = smul.addr %s250, 8
      %s252 = scalar_lea.vmem %s0, %s251
      %s253 = smul.u32 4, %s16
      %s254 = smul.u32 4, %s16
      %p255 = scmp.lt.s32.totalorder %s254, 11
      %s256 = scalar_select %p255, %s254, 11
      %s257 = smul.addr %s256, 8
      %s258 = scalar_lea.vmem %s1, %s257
      %s259 = smul.u32 4, %s16
      %s260 = smul.u32 4, %s16
      %p261 = scmp.lt.s32.totalorder %s260, 11
      %s262 = scalar_select %p261, %s260, 11
      %s263 = smul.addr %s262, 8
      %s264 = scalar_lea.vmem %s2, %s263
      %s265 = smul.u32 4, %s16
      %s266 = smul.u32 4, %s16
      %p267 = scmp.lt.s32.totalorder %s266, 11
      %s268 = scalar_select %p267, %s266, 11
      %s269 = smul.addr %s268, 8
      %s270 = scalar_lea.vmem %s5, %s269
      %s271 = smul.u32 4, %s16
      %v272 = vld [vmem:[%s252] sm:$0xff]
      %v273 = vld [vmem:[%s252 + $0x8] sm:$0xff]
      %v274 = vld [vmem:[%s252 + $0x10] sm:$0xff]
      %v275 = vld [vmem:[%s252 + $0x18] sm:$0xff]
      %v276 = vld [vmem:[%s4] sm:$0xff]
      %v277 = vld [vmem:[%s4 + $0x8] sm:$0xff]
      %v278 = vld [vmem:[%s4 + $0x10] sm:$0xff]
      %v279 = vld [vmem:[%s4 + $0x18] sm:$0xff]
      %v280 = vld [vmem:[%s4 + $0x20] sm:$0xff]
      %v281 = vld [vmem:[%s4 + $0x28] sm:$0xff]
      %v282 = vld [vmem:[%s4 + $0x30] sm:$0xff]
      %v283 = vld [vmem:[%s4 + $0x38] sm:$0xff]
      %vm284 = vcmask 523264
      %v286 = vsel %vm284, %v272, 0
      %v289 = vsel %vm284, %v273, 0
      %v292 = vsel %vm284, %v274, 0
      %v295 = vsel %vm284, %v275, 0
      %297 = vmatprep.subr.mxu0 0.0
      %298 = vmatpush1.msra.mxu0 0.0
      %299 = vmatprep.subr.mxu0 0.0
      %300 = vmatpush1.msra.mxu0 0.0
      %301 = vmatprep.subr.mxu0 0.0
      %302 = vmatpush1.msra.mxu0 0.0
      %303 = vmatprep.subr.mxu0 0.0
      %304 = vmatpush1.msra.mxu0 0.0
      %305 = vmatprep.subr.mxu0 0.0
      %306 = vmatpush1.msra.mxu0 0.0
      %307 = vmatprep.subr.mxu0 0.0
      %308 = vmatpush1.msra.mxu0 0.0
      %309 = vmatprep.subr.mxu0 0.0
      %310 = vmatpush1.msra.mxu0 0.0
      %311 = vmatprep.subr.mxu0 0.0
      %312 = vmatpush1.msra.mxu0 0.0
      %313 = vmatprep.subr.mxu0 0.0
      %314 = vmatpush1.msra.mxu0 %v283
      %315 = vmatprep.subr.mxu0 0.0
      %316 = vmatpush1.msra.mxu0 %v282
      %317 = vmatprep.subr.mxu0 0.0
      %318 = vmatpush1.msra.mxu0 %v281
      %319 = vmatprep.subr.mxu0 0.0
      %320 = vmatpush1.msra.mxu0 %v280
      %321 = vmatprep.subr.mxu0 0.0
      %322 = vmatpush1.msra.mxu0 %v279
      %323 = vmatprep.subr.mxu0 0.0
      %324 = vmatpush1.msra.mxu0 %v278
      %325 = vmatprep.subr.mxu0 0.0
      %326 = vmatpush1.msra.mxu0 %v277
      %327 = vmatprep.subr.mxu0 0.0
      %328 = vmatpush1.msra.mxu0 %v276
      %329 = vmatprep.subr.mxu0 0.0
      %330 = vmatpush2.msra.mxu0 0.0
      %331 = vmatprep.subr.mxu0 0.0
      %332 = vmatpush2.msra.mxu0 0.0
      %333 = vmatprep.subr.mxu0 0.0
      %334 = vmatpush2.msra.mxu0 0.0
      %335 = vmatprep.subr.mxu0 0.0
      %336 = vmatpush2.msra.mxu0 0.0
      %337 = vmatprep.subr.mxu0 0.0
      %338 = vmatpush2.msra.mxu0 0.0
      %339 = vmatprep.subr.mxu0 0.0
      %340 = vmatpush2.msra.mxu0 0.0
      %341 = vmatprep.subr.mxu0 0.0
      %342 = vmatpush2.msra.mxu0 0.0
      %343 = vmatprep.subr.mxu0 0.0
      %344 = vmatpush2.msra.mxu0 0.0
      %345 = vmatprep.subr.mxu0 0.0
      %346 = vmatpush2.msra.mxu0 0.0
      %347 = vmatprep.subr.mxu0 0.0
      %348 = vmatpush2.msra.mxu0 0.0
      %349 = vmatprep.subr.mxu0 0.0
      %350 = vmatpush2.msra.mxu0 0.0
      %351 = vmatprep.subr.mxu0 0.0
      %352 = vmatpush2.msra.mxu0 0.0
      %353 = vmatprep.subr.mxu0 0.0
      %354 = vmatpush2.msra.mxu0 0.0
      %355 = vmatprep.subr.mxu0 0.0
      %356 = vmatpush2.msra.mxu0 0.0
      %357 = vmatprep.subr.mxu0 0.0
      %358 = vmatpush2.msra.mxu0 0.0
      %359 = vmatprep.subr.mxu0 0.0
      %360 = vmatpush2.msra.mxu0 0.0
      %361 = vmatprep.mubr.f32.mxu0 0.0
      %362 = vmatmul.mubr.f32.gmra.mxu0 %v286
      %v363 = vpop.f32.mrf.mxu0
      %v364 = vadd.f32 0.0, %v363
      %v365 = vpop.f32.mrf.mxu0
      %366 = vmatprep.mubr.f32.mxu0 0.0
      %367 = vmatmul.mubr.f32.gmra.mxu0 %v289
      %v368 = vpop.f32.mrf.mxu0
      %v369 = vadd.f32 0.0, %v368
      %v370 = vpop.f32.mrf.mxu0
      %371 = vmatprep.mubr.f32.mxu0 0.0
      %372 = vmatmul.mubr.f32.gmra.mxu0 %v292
      %v373 = vpop.f32.mrf.mxu0
      %v374 = vadd.f32 0.0, %v373
      %v375 = vpop.f32.mrf.mxu0
      %376 = vmatprep.mubr.f32.mxu0 0.0
      %377 = vmatmul.mubr.f32.gmra.mxu0 %v295
      %v378 = vpop.f32.mrf.mxu0
      %v379 = vadd.f32 0.0, %v378
      %v380 = vpop.f32.mrf.mxu0
      %381 = vdwg.mxu0
      %vm382 = vcmp.ge.f32.partialorder %v364, 0.0
      %vm383 = vcmp.ge.f32.partialorder %v369, 0.0
      %vm384 = vcmp.ge.f32.partialorder %v374, 0.0
      %vm385 = vcmp.ge.f32.partialorder %v379, 0.0
      %v386 = vmul.f32 %v364, 0.2
      %v387 = vmul.f32 %v369, 0.2
      %v388 = vmul.f32 %v374, 0.2
      %v389 = vmul.f32 %v379, 0.2
      %v390 = vsel %vm382, %v364, %v386
      %v391 = vsel %vm383, %v369, %v387
      %v392 = vsel %vm384, %v374, %v388
      %v393 = vsel %vm385, %v379, %v389
      %v394 = vld [vmem:[%s258] sm:$0xff]
      %v395 = vld [vmem:[%s258 + $0x8] sm:$0xff]
      %v396 = vld [vmem:[%s258 + $0x10] sm:$0xff]
      %v397 = vld [vmem:[%s258 + $0x18] sm:$0xff]
      %s398 = scalar_lea.vmem %s4, 64
      %v399 = vld [vmem:[%s398] sm:$0xff]
      %v400 = vld [vmem:[%s398 + $0x8] sm:$0xff]
      %v401 = vld [vmem:[%s398 + $0x10] sm:$0xff]
      %v402 = vld [vmem:[%s398 + $0x18] sm:$0xff]
      %v403 = vld [vmem:[%s398 + $0x20] sm:$0xff]
      %v404 = vld [vmem:[%s398 + $0x28] sm:$0xff]
      %v405 = vld [vmem:[%s398 + $0x30] sm:$0xff]
      %v406 = vld [vmem:[%s398 + $0x38] sm:$0xff]
      %v408 = vsel %vm284, %v394, 0
      %v411 = vsel %vm284, %v395, 0
      %v414 = vsel %vm284, %v396, 0
      %v417 = vsel %vm284, %v397, 0
      %419 = vmatprep.subr.mxu0 0.0
      %420 = vmatpush1.msra.mxu0 0.0
      %421 = vmatprep.subr.mxu0 0.0
      %422 = vmatpush1.msra.mxu0 0.0
      %423 = vmatprep.subr.mxu0 0.0
      %424 = vmatpush1.msra.mxu0 0.0
      %425 = vmatprep.subr.mxu0 0.0
      %426 = vmatpush1.msra.mxu0 0.0
      %427 = vmatprep.subr.mxu0 0.0
      %428 = vmatpush1.msra.mxu0 0.0
      %429 = vmatprep.subr.mxu0 0.0
      %430 = vmatpush1.msra.mxu0 0.0
      %431 = vmatprep.subr.mxu0 0.0
      %432 = vmatpush1.msra.mxu0 0.0
      %433 = vmatprep.subr.mxu0 0.0
      %434 = vmatpush1.msra.mxu0 0.0
      %435 = vmatprep.subr.mxu0 0.0
      %436 = vmatpush1.msra.mxu0 %v406
      %437 = vmatprep.subr.mxu0 0.0
      %438 = vmatpush1.msra.mxu0 %v405
      %439 = vmatprep.subr.mxu0 0.0
      %440 = vmatpush1.msra.mxu0 %v404
      %441 = vmatprep.subr.mxu0 0.0
      %442 = vmatpush1.msra.mxu0 %v403
      %443 = vmatprep.subr.mxu0 0.0
      %444 = vmatpush1.msra.mxu0 %v402
      %445 = vmatprep.subr.mxu0 0.0
      %446 = vmatpush1.msra.mxu0 %v401
      %447 = vmatprep.subr.mxu0 0.0
      %448 = vmatpush1.msra.mxu0 %v400
      %449 = vmatprep.subr.mxu0 0.0
      %450 = vmatpush1.msra.mxu0 %v399
      %451 = vmatprep.subr.mxu0 0.0
      %452 = vmatpush2.msra.mxu0 0.0
      %453 = vmatprep.subr.mxu0 0.0
      %454 = vmatpush2.msra.mxu0 0.0
      %455 = vmatprep.subr.mxu0 0.0
      %456 = vmatpush2.msra.mxu0 0.0
      %457 = vmatprep.subr.mxu0 0.0
      %458 = vmatpush2.msra.mxu0 0.0
      %459 = vmatprep.subr.mxu0 0.0
      %460 = vmatpush2.msra.mxu0 0.0
      %461 = vmatprep.subr.mxu0 0.0
      %462 = vmatpush2.msra.mxu0 0.0
      %463 = vmatprep.subr.mxu0 0.0
      %464 = vmatpush2.msra.mxu0 0.0
      %465 = vmatprep.subr.mxu0 0.0
      %466 = vmatpush2.msra.mxu0 0.0
      %467 = vmatprep.subr.mxu0 0.0
      %468 = vmatpush2.msra.mxu0 0.0
      %469 = vmatprep.subr.mxu0 0.0
      %470 = vmatpush2.msra.mxu0 0.0
      %471 = vmatprep.subr.mxu0 0.0
      %472 = vmatpush2.msra.mxu0 0.0
      %473 = vmatprep.subr.mxu0 0.0
      %474 = vmatpush2.msra.mxu0 0.0
      %475 = vmatprep.subr.mxu0 0.0
      %476 = vmatpush2.msra.mxu0 0.0
      %477 = vmatprep.subr.mxu0 0.0
      %478 = vmatpush2.msra.mxu0 0.0
      %479 = vmatprep.subr.mxu0 0.0
      %480 = vmatpush2.msra.mxu0 0.0
      %481 = vmatprep.subr.mxu0 0.0
      %482 = vmatpush2.msra.mxu0 0.0
      %483 = vmatprep.mubr.f32.mxu0 0.0
      %484 = vmatmul.mubr.f32.gmra.mxu0 %v408
      %v485 = vpop.f32.mrf.mxu0
      %v486 = vadd.f32 0.0, %v485
      %v487 = vpop.f32.mrf.mxu0
      %488 = vmatprep.mubr.f32.mxu0 0.0
      %489 = vmatmul.mubr.f32.gmra.mxu0 %v411
      %v490 = vpop.f32.mrf.mxu0
      %v491 = vadd.f32 0.0, %v490
      %v492 = vpop.f32.mrf.mxu0
      %493 = vmatprep.mubr.f32.mxu0 0.0
      %494 = vmatmul.mubr.f32.gmra.mxu0 %v414
      %v495 = vpop.f32.mrf.mxu0
      %v496 = vadd.f32 0.0, %v495
      %v497 = vpop.f32.mrf.mxu0
      %498 = vmatprep.mubr.f32.mxu0 0.0
      %499 = vmatmul.mubr.f32.gmra.mxu0 %v417
      %v500 = vpop.f32.mrf.mxu0
      %v501 = vadd.f32 0.0, %v500
      %v502 = vpop.f32.mrf.mxu0
      %503 = vdwg.mxu0
      %vm504 = vcmp.ge.f32.partialorder %v486, 0.0
      %vm505 = vcmp.ge.f32.partialorder %v491, 0.0
      %vm506 = vcmp.ge.f32.partialorder %v496, 0.0
      %vm507 = vcmp.ge.f32.partialorder %v501, 0.0
      %v508 = vmul.f32 %v486, 0.2
      %v509 = vmul.f32 %v491, 0.2
      %v510 = vmul.f32 %v496, 0.2
      %v511 = vmul.f32 %v501, 0.2
      %v512 = vsel %vm504, %v486, %v508
      %v513 = vsel %vm505, %v491, %v509
      %v514 = vsel %vm506, %v496, %v510
      %v515 = vsel %vm507, %v501, %v511
      %v516 = vld [vmem:[%s264] sm:$0xff]
      %v517 = vld [vmem:[%s264 + $0x8] sm:$0xff]
      %v518 = vld [vmem:[%s264 + $0x10] sm:$0xff]
      %v519 = vld [vmem:[%s264 + $0x18] sm:$0xff]
      %s520 = scalar_lea.vmem %s4, 128
      %v521 = vld [vmem:[%s520] sm:$0xff]
      %v522 = vld [vmem:[%s520 + $0x8] sm:$0xff]
      %v523 = vld [vmem:[%s520 + $0x10] sm:$0xff]
      %v524 = vld [vmem:[%s520 + $0x18] sm:$0xff]
      %v525 = vld [vmem:[%s520 + $0x20] sm:$0xff]
      %v526 = vld [vmem:[%s520 + $0x28] sm:$0xff]
      %v527 = vld [vmem:[%s520 + $0x30] sm:$0xff]
      %v528 = vld [vmem:[%s520 + $0x38] sm:$0xff]
      %v530 = vsel %vm284, %v516, 0
      %v533 = vsel %vm284, %v517, 0
      %v536 = vsel %vm284, %v518, 0
      %v539 = vsel %vm284, %v519, 0
      %541 = vmatprep.subr.mxu0 0.0
      %542 = vmatpush1.msra.mxu0 0.0
      %543 = vmatprep.subr.mxu0 0.0
      %544 = vmatpush1.msra.mxu0 0.0
      %545 = vmatprep.subr.mxu0 0.0
      %546 = vmatpush1.msra.mxu0 0.0
      %547 = vmatprep.subr.mxu0 0.0
      %548 = vmatpush1.msra.mxu0 0.0
      %549 = vmatprep.subr.mxu0 0.0
      %550 = vmatpush1.msra.mxu0 0.0
      %551 = vmatprep.subr.mxu0 0.0
      %552 = vmatpush1.msra.mxu0 0.0
      %553 = vmatprep.subr.mxu0 0.0
      %554 = vmatpush1.msra.mxu0 0.0
      %555 = vmatprep.subr.mxu0 0.0
      %556 = vmatpush1.msra.mxu0 0.0
      %557 = vmatprep.subr.mxu0 0.0
      %558 = vmatpush1.msra.mxu0 %v528
      %559 = vmatprep.subr.mxu0 0.0
      %560 = vmatpush1.msra.mxu0 %v527
      %561 = vmatprep.subr.mxu0 0.0
      %562 = vmatpush1.msra.mxu0 %v526
      %563 = vmatprep.subr.mxu0 0.0
      %564 = vmatpush1.msra.mxu0 %v525
      %565 = vmatprep.subr.mxu0 0.0
      %566 = vmatpush1.msra.mxu0 %v524
      %567 = vmatprep.subr.mxu0 0.0
      %568 = vmatpush1.msra.mxu0 %v523
      %569 = vmatprep.subr.mxu0 0.0
      %570 = vmatpush1.msra.mxu0 %v522
      %571 = vmatprep.subr.mxu0 0.0
      %572 = vmatpush1.msra.mxu0 %v521
      %573 = vmatprep.subr.mxu0 0.0
      %574 = vmatpush2.msra.mxu0 0.0
      %575 = vmatprep.subr.mxu0 0.0
      %576 = vmatpush2.msra.mxu0 0.0
      %577 = vmatprep.subr.mxu0 0.0
      %578 = vmatpush2.msra.mxu0 0.0
      %579 = vmatprep.subr.mxu0 0.0
      %580 = vmatpush2.msra.mxu0 0.0
      %581 = vmatprep.subr.mxu0 0.0
      %582 = vmatpush2.msra.mxu0 0.0
      %583 = vmatprep.subr.mxu0 0.0
      %584 = vmatpush2.msra.mxu0 0.0
      %585 = vmatprep.subr.mxu0 0.0
      %586 = vmatpush2.msra.mxu0 0.0
      %587 = vmatprep.subr.mxu0 0.0
      %588 = vmatpush2.msra.mxu0 0.0
      %589 = vmatprep.subr.mxu0 0.0
      %590 = vmatpush2.msra.mxu0 0.0
      %591 = vmatprep.subr.mxu0 0.0
      %592 = vmatpush2.msra.mxu0 0.0
      %593 = vmatprep.subr.mxu0 0.0
      %594 = vmatpush2.msra.mxu0 0.0
      %595 = vmatprep.subr.mxu0 0.0
      %596 = vmatpush2.msra.mxu0 0.0
      %597 = vmatprep.subr.mxu0 0.0
      %598 = vmatpush2.msra.mxu0 0.0
      %599 = vmatprep.subr.mxu0 0.0
      %600 = vmatpush2.msra.mxu0 0.0
      %601 = vmatprep.subr.mxu0 0.0
      %602 = vmatpush2.msra.mxu0 0.0
      %603 = vmatprep.subr.mxu0 0.0
      %604 = vmatpush2.msra.mxu0 0.0
      %605 = vmatprep.mubr.f32.mxu0 0.0
      %606 = vmatmul.mubr.f32.gmra.mxu0 %v530
      %v607 = vpop.f32.mrf.mxu0
      %v608 = vadd.f32 0.0, %v607
      %v609 = vpop.f32.mrf.mxu0
      %610 = vmatprep.mubr.f32.mxu0 0.0
      %611 = vmatmul.mubr.f32.gmra.mxu0 %v533
      %v612 = vpop.f32.mrf.mxu0
      %v613 = vadd.f32 0.0, %v612
      %v614 = vpop.f32.mrf.mxu0
      %615 = vmatprep.mubr.f32.mxu0 0.0
      %616 = vmatmul.mubr.f32.gmra.mxu0 %v536
      %v617 = vpop.f32.mrf.mxu0
      %v618 = vadd.f32 0.0, %v617
      %v619 = vpop.f32.mrf.mxu0
      %620 = vmatprep.mubr.f32.mxu0 0.0
      %621 = vmatmul.mubr.f32.gmra.mxu0 %v539
      %v622 = vpop.f32.mrf.mxu0
      %v623 = vadd.f32 0.0, %v622
      %v624 = vpop.f32.mrf.mxu0
      %625 = vdwg.mxu0
      %vm626 = vcmp.ge.f32.partialorder %v608, 0.0
      %vm627 = vcmp.ge.f32.partialorder %v613, 0.0
      %vm628 = vcmp.ge.f32.partialorder %v618, 0.0
      %vm629 = vcmp.ge.f32.partialorder %v623, 0.0
      %v630 = vmul.f32 %v608, 0.2
      %v631 = vmul.f32 %v613, 0.2
      %v632 = vmul.f32 %v618, 0.2
      %v633 = vmul.f32 %v623, 0.2
      %v634 = vsel %vm626, %v608, %v630
      %v635 = vsel %vm627, %v613, %v631
      %v636 = vsel %vm628, %v618, %v632
      %v637 = vsel %vm629, %v623, %v633
      %v638 = vmax.f32 %v390, %v512
      %v639 = vmax.f32 %v391, %v513
      %v640 = vmax.f32 %v392, %v514
      %v641 = vmax.f32 %v393, %v515
      %v642 = vmax.f32 %v638, %v634
      %v643 = vmax.f32 %v639, %v635
      %v644 = vmax.f32 %v640, %v636
      %v645 = vmax.f32 %v641, %v637
      %v646 = vsub.f32 %v390, %v642
      %v647 = vsub.f32 %v391, %v643
      %v648 = vsub.f32 %v392, %v644
      %v649 = vsub.f32 %v393, %v645
      %v650 = vmul.f32 %v646, 1.442695
      %v651 = vpow.pop %v650
      %v652 = vmul.f32 %v647, 1.442695
      %v653 = vpow.pop %v652
      %v654 = vmul.f32 %v648, 1.442695
      %v655 = vpow.pop %v654
      %v656 = vmul.f32 %v649, 1.442695
      %v657 = vpow.pop %v656
      %v658 = vsub.f32 %v512, %v642
      %v659 = vsub.f32 %v513, %v643
      %v660 = vsub.f32 %v514, %v644
      %v661 = vsub.f32 %v515, %v645
      %v662 = vmul.f32 %v658, 1.442695
      %v663 = vpow.pop %v662
      %v664 = vmul.f32 %v659, 1.442695
      %v665 = vpow.pop %v664
      %v666 = vmul.f32 %v660, 1.442695
      %v667 = vpow.pop %v666
      %v668 = vmul.f32 %v661, 1.442695
      %v669 = vpow.pop %v668
      %v670 = vsub.f32 %v634, %v642
      %v671 = vsub.f32 %v635, %v643
      %v672 = vsub.f32 %v636, %v644
      %v673 = vsub.f32 %v637, %v645
      %v674 = vmul.f32 %v670, 1.442695
      %v675 = vpow.pop %v674
      %v676 = vmul.f32 %v671, 1.442695
      %v677 = vpow.pop %v676
      %v678 = vmul.f32 %v672, 1.442695
      %v679 = vpow.pop %v678
      %v680 = vmul.f32 %v673, 1.442695
      %v681 = vpow.pop %v680
      %v682 = vadd.f32 %v651, %v663
      %v683 = vadd.f32 %v653, %v665
      %v684 = vadd.f32 %v655, %v667
      %v685 = vadd.f32 %v657, %v669
      %v686 = vadd.f32 %v682, %v675
      %v687 = vadd.f32 %v683, %v677
      %v688 = vadd.f32 %v684, %v679
      %v689 = vadd.f32 %v685, %v681
      %v690 = vrcp.pop %v686
      %v691 = vmul.f32 1.0, %v690
      %v692 = vrcp.pop %v687
      %v693 = vmul.f32 1.0, %v692
      %v694 = vrcp.pop %v688
      %v695 = vmul.f32 1.0, %v694
      %v696 = vrcp.pop %v689
      %v697 = vmul.f32 1.0, %v696
      %v698 = vld [vmem:[%s3] sm:$0xff]
      %v699 = vld [vmem:[%s3 + $0x8] sm:$0xff]
      %v700 = vld [vmem:[%s3 + $0x10] sm:$0xff]
      %v701 = vld [vmem:[%s3 + $0x18] sm:$0xff]
      %v702 = vld [vmem:[%s3 + $0x20] sm:$0xff]
      %v703 = vld [vmem:[%s3 + $0x28] sm:$0xff]
      %v704 = vld [vmem:[%s3 + $0x30] sm:$0xff]
      %v705 = vld [vmem:[%s3 + $0x38] sm:$0xff]
      %706 = vmatprep.subr.mxu0 0.0
      %707 = vmatpush1.msra.mxu0 0.0
      %708 = vmatprep.subr.mxu0 0.0
      %709 = vmatpush1.msra.mxu0 0.0
      %710 = vmatprep.subr.mxu0 0.0
      %711 = vmatpush1.msra.mxu0 0.0
      %712 = vmatprep.subr.mxu0 0.0
      %713 = vmatpush1.msra.mxu0 0.0
      %714 = vmatprep.subr.mxu0 0.0
      %715 = vmatpush1.msra.mxu0 0.0
      %716 = vmatprep.subr.mxu0 0.0
      %717 = vmatpush1.msra.mxu0 0.0
      %718 = vmatprep.subr.mxu0 0.0
      %719 = vmatpush1.msra.mxu0 0.0
      %720 = vmatprep.subr.mxu0 0.0
      %721 = vmatpush1.msra.mxu0 0.0
      %722 = vmatprep.subr.mxu0 0.0
      %723 = vmatpush1.msra.mxu0 %v705
      %724 = vmatprep.subr.mxu0 0.0
      %725 = vmatpush1.msra.mxu0 %v704
      %726 = vmatprep.subr.mxu0 0.0
      %727 = vmatpush1.msra.mxu0 %v703
      %728 = vmatprep.subr.mxu0 0.0
      %729 = vmatpush1.msra.mxu0 %v702
      %730 = vmatprep.subr.mxu0 0.0
      %731 = vmatpush1.msra.mxu0 %v701
      %732 = vmatprep.subr.mxu0 0.0
      %733 = vmatpush1.msra.mxu0 %v700
      %734 = vmatprep.subr.mxu0 0.0
      %735 = vmatpush1.msra.mxu0 %v699
      %736 = vmatprep.subr.mxu0 0.0
      %737 = vmatpush1.msra.mxu0 %v698
      %738 = vmatprep.subr.mxu0 0.0
      %739 = vmatpush2.msra.mxu0 0.0
      %740 = vmatprep.subr.mxu0 0.0
      %741 = vmatpush2.msra.mxu0 0.0
      %742 = vmatprep.subr.mxu0 0.0
      %743 = vmatpush2.msra.mxu0 0.0
      %744 = vmatprep.subr.mxu0 0.0
      %745 = vmatpush2.msra.mxu0 0.0
      %746 = vmatprep.subr.mxu0 0.0
      %747 = vmatpush2.msra.mxu0 0.0
      %748 = vmatprep.subr.mxu0 0.0
      %749 = vmatpush2.msra.mxu0 0.0
      %750 = vmatprep.subr.mxu0 0.0
      %751 = vmatpush2.msra.mxu0 0.0
      %752 = vmatprep.subr.mxu0 0.0
      %753 = vmatpush2.msra.mxu0 0.0
      %754 = vmatprep.subr.mxu0 0.0
      %755 = vmatpush2.msra.mxu0 0.0
      %756 = vmatprep.subr.mxu0 0.0
      %757 = vmatpush2.msra.mxu0 0.0
      %758 = vmatprep.subr.mxu0 0.0
      %759 = vmatpush2.msra.mxu0 0.0
      %760 = vmatprep.subr.mxu0 0.0
      %761 = vmatpush2.msra.mxu0 0.0
      %762 = vmatprep.subr.mxu0 0.0
      %763 = vmatpush2.msra.mxu0 0.0
      %764 = vmatprep.subr.mxu0 0.0
      %765 = vmatpush2.msra.mxu0 0.0
      %766 = vmatprep.subr.mxu0 0.0
      %767 = vmatpush2.msra.mxu0 0.0
      %768 = vmatprep.subr.mxu0 0.0
      %769 = vmatpush2.msra.mxu0 0.0
      %770 = vmatprep.mubr.f32.mxu0 0.0
      %771 = vmatmul.mubr.f32.gmra.mxu0 %v286
      %v772 = vpop.f32.mrf.mxu0
      %v773 = vadd.f32 0.0, %v772
      %v774 = vpop.f32.mrf.mxu0
      %775 = vmatprep.mubr.f32.mxu0 0.0
      %776 = vmatmul.mubr.f32.gmra.mxu0 %v289
      %v777 = vpop.f32.mrf.mxu0
      %v778 = vadd.f32 0.0, %v777
      %v779 = vpop.f32.mrf.mxu0
      %780 = vmatprep.mubr.f32.mxu0 0.0
      %781 = vmatmul.mubr.f32.gmra.mxu0 %v292
      %v782 = vpop.f32.mrf.mxu0
      %v783 = vadd.f32 0.0, %v782
      %v784 = vpop.f32.mrf.mxu0
      %785 = vmatprep.mubr.f32.mxu0 0.0
      %786 = vmatmul.mubr.f32.gmra.mxu0 %v295
      %v787 = vpop.f32.mrf.mxu0
      %v788 = vadd.f32 0.0, %v787
      %v789 = vpop.f32.mrf.mxu0
      %790 = vdwg.mxu0
      %v791 = vmul.f32 %v773, %v651
      %v792 = vmul.f32 %v778, %v653
      %v793 = vmul.f32 %v783, %v655
      %v794 = vmul.f32 %v788, %v657
      %s795 = scalar_lea.vmem %s3, 64
      %v796 = vld [vmem:[%s795] sm:$0xff]
      %v797 = vld [vmem:[%s795 + $0x8] sm:$0xff]
      %v798 = vld [vmem:[%s795 + $0x10] sm:$0xff]
      %v799 = vld [vmem:[%s795 + $0x18] sm:$0xff]
      %v800 = vld [vmem:[%s795 + $0x20] sm:$0xff]
      %v801 = vld [vmem:[%s795 + $0x28] sm:$0xff]
      %v802 = vld [vmem:[%s795 + $0x30] sm:$0xff]
      %v803 = vld [vmem:[%s795 + $0x38] sm:$0xff]
      %804 = vmatprep.subr.mxu0 0.0
      %805 = vmatpush1.msra.mxu0 0.0
      %806 = vmatprep.subr.mxu0 0.0
      %807 = vmatpush1.msra.mxu0 0.0
      %808 = vmatprep.subr.mxu0 0.0
      %809 = vmatpush1.msra.mxu0 0.0
      %810 = vmatprep.subr.mxu0 0.0
      %811 = vmatpush1.msra.mxu0 0.0
      %812 = vmatprep.subr.mxu0 0.0
      %813 = vmatpush1.msra.mxu0 0.0
      %814 = vmatprep.subr.mxu0 0.0
      %815 = vmatpush1.msra.mxu0 0.0
      %816 = vmatprep.subr.mxu0 0.0
      %817 = vmatpush1.msra.mxu0 0.0
      %818 = vmatprep.subr.mxu0 0.0
      %819 = vmatpush1.msra.mxu0 0.0
      %820 = vmatprep.subr.mxu0 0.0
      %821 = vmatpush1.msra.mxu0 %v803
      %822 = vmatprep.subr.mxu0 0.0
      %823 = vmatpush1.msra.mxu0 %v802
      %824 = vmatprep.subr.mxu0 0.0
      %825 = vmatpush1.msra.mxu0 %v801
      %826 = vmatprep.subr.mxu0 0.0
      %827 = vmatpush1.msra.mxu0 %v800
      %828 = vmatprep.subr.mxu0 0.0
      %829 = vmatpush1.msra.mxu0 %v799
      %830 = vmatprep.subr.mxu0 0.0
      %831 = vmatpush1.msra.mxu0 %v798
      %832 = vmatprep.subr.mxu0 0.0
      %833 = vmatpush1.msra.mxu0 %v797
      %834 = vmatprep.subr.mxu0 0.0
      %835 = vmatpush1.msra.mxu0 %v796
      %836 = vmatprep.subr.mxu0 0.0
      %837 = vmatpush2.msra.mxu0 0.0
      %838 = vmatprep.subr.mxu0 0.0
      %839 = vmatpush2.msra.mxu0 0.0
      %840 = vmatprep.subr.mxu0 0.0
      %841 = vmatpush2.msra.mxu0 0.0
      %842 = vmatprep.subr.mxu0 0.0
      %843 = vmatpush2.msra.mxu0 0.0
      %844 = vmatprep.subr.mxu0 0.0
      %845 = vmatpush2.msra.mxu0 0.0
      %846 = vmatprep.subr.mxu0 0.0
      %847 = vmatpush2.msra.mxu0 0.0
      %848 = vmatprep.subr.mxu0 0.0
      %849 = vmatpush2.msra.mxu0 0.0
      %850 = vmatprep.subr.mxu0 0.0
      %851 = vmatpush2.msra.mxu0 0.0
      %852 = vmatprep.subr.mxu0 0.0
      %853 = vmatpush2.msra.mxu0 0.0
      %854 = vmatprep.subr.mxu0 0.0
      %855 = vmatpush2.msra.mxu0 0.0
      %856 = vmatprep.subr.mxu0 0.0
      %857 = vmatpush2.msra.mxu0 0.0
      %858 = vmatprep.subr.mxu0 0.0
      %859 = vmatpush2.msra.mxu0 0.0
      %860 = vmatprep.subr.mxu0 0.0
      %861 = vmatpush2.msra.mxu0 0.0
      %862 = vmatprep.subr.mxu0 0.0
      %863 = vmatpush2.msra.mxu0 0.0
      %864 = vmatprep.subr.mxu0 0.0
      %865 = vmatpush2.msra.mxu0 0.0
      %866 = vmatprep.subr.mxu0 0.0
      %867 = vmatpush2.msra.mxu0 0.0
      %868 = vmatprep.mubr.f32.mxu0 0.0
      %869 = vmatmul.mubr.f32.gmra.mxu0 %v408
      %v870 = vpop.f32.mrf.mxu0
      %v871 = vadd.f32 0.0, %v870
      %v872 = vpop.f32.mrf.mxu0
      %873 = vmatprep.mubr.f32.mxu0 0.0
      %874 = vmatmul.mubr.f32.gmra.mxu0 %v411
      %v875 = vpop.f32.mrf.mxu0
      %v876 = vadd.f32 0.0, %v875
      %v877 = vpop.f32.mrf.mxu0
      %878 = vmatprep.mubr.f32.mxu0 0.0
      %879 = vmatmul.mubr.f32.gmra.mxu0 %v414
      %v880 = vpop.f32.mrf.mxu0
      %v881 = vadd.f32 0.0, %v880
      %v882 = vpop.f32.mrf.mxu0
      %883 = vmatprep.mubr.f32.mxu0 0.0
      %884 = vmatmul.mubr.f32.gmra.mxu0 %v417
      %v885 = vpop.f32.mrf.mxu0
      %v886 = vadd.f32 0.0, %v885
      %v887 = vpop.f32.mrf.mxu0
      %888 = vdwg.mxu0
      %v889 = vmul.f32 %v871, %v663
      %v890 = vmul.f32 %v876, %v665
      %v891 = vmul.f32 %v881, %v667
      %v892 = vmul.f32 %v886, %v669
      %v893 = vadd.f32 %v791, %v889
      %v894 = vadd.f32 %v792, %v890
      %v895 = vadd.f32 %v793, %v891
      %v896 = vadd.f32 %v794, %v892
      %s897 = scalar_lea.vmem %s3, 128
      %v898 = vld [vmem:[%s897] sm:$0xff]
      %v899 = vld [vmem:[%s897 + $0x8] sm:$0xff]
      %v900 = vld [vmem:[%s897 + $0x10] sm:$0xff]
      %v901 = vld [vmem:[%s897 + $0x18] sm:$0xff]
      %v902 = vld [vmem:[%s897 + $0x20] sm:$0xff]
      %v903 = vld [vmem:[%s897 + $0x28] sm:$0xff]
      %v904 = vld [vmem:[%s897 + $0x30] sm:$0xff]
      %v905 = vld [vmem:[%s897 + $0x38] sm:$0xff]
      %906 = vmatprep.subr.mxu0 0.0
      %907 = vmatpush1.msra.mxu0 0.0
      %908 = vmatprep.subr.mxu0 0.0
      %909 = vmatpush1.msra.mxu0 0.0
      %910 = vmatprep.subr.mxu0 0.0
      %911 = vmatpush1.msra.mxu0 0.0
      %912 = vmatprep.subr.mxu0 0.0
      %913 = vmatpush1.msra.mxu0 0.0
      %914 = vmatprep.subr.mxu0 0.0
      %915 = vmatpush1.msra.mxu0 0.0
      %916 = vmatprep.subr.mxu0 0.0
      %917 = vmatpush1.msra.mxu0 0.0
      %918 = vmatprep.subr.mxu0 0.0
      %919 = vmatpush1.msra.mxu0 0.0
      %920 = vmatprep.subr.mxu0 0.0
      %921 = vmatpush1.msra.mxu0 0.0
      %922 = vmatprep.subr.mxu0 0.0
      %923 = vmatpush1.msra.mxu0 %v905
      %924 = vmatprep.subr.mxu0 0.0
      %925 = vmatpush1.msra.mxu0 %v904
      %926 = vmatprep.subr.mxu0 0.0
      %927 = vmatpush1.msra.mxu0 %v903
      %928 = vmatprep.subr.mxu0 0.0
      %929 = vmatpush1.msra.mxu0 %v902
      %930 = vmatprep.subr.mxu0 0.0
      %931 = vmatpush1.msra.mxu0 %v901
      %932 = vmatprep.subr.mxu0 0.0
      %933 = vmatpush1.msra.mxu0 %v900
      %934 = vmatprep.subr.mxu0 0.0
      %935 = vmatpush1.msra.mxu0 %v899
      %936 = vmatprep.subr.mxu0 0.0
      %937 = vmatpush1.msra.mxu0 %v898
      %938 = vmatprep.subr.mxu0 0.0
      %939 = vmatpush2.msra.mxu0 0.0
      %940 = vmatprep.subr.mxu0 0.0
      %941 = vmatpush2.msra.mxu0 0.0
      %942 = vmatprep.subr.mxu0 0.0
      %943 = vmatpush2.msra.mxu0 0.0
      %944 = vmatprep.subr.mxu0 0.0
      %945 = vmatpush2.msra.mxu0 0.0
      %946 = vmatprep.subr.mxu0 0.0
      %947 = vmatpush2.msra.mxu0 0.0
      %948 = vmatprep.subr.mxu0 0.0
      %949 = vmatpush2.msra.mxu0 0.0
      %950 = vmatprep.subr.mxu0 0.0
      %951 = vmatpush2.msra.mxu0 0.0
      %952 = vmatprep.subr.mxu0 0.0
      %953 = vmatpush2.msra.mxu0 0.0
      %954 = vmatprep.subr.mxu0 0.0
      %955 = vmatpush2.msra.mxu0 0.0
      %956 = vmatprep.subr.mxu0 0.0
      %957 = vmatpush2.msra.mxu0 0.0
      %958 = vmatprep.subr.mxu0 0.0
      %959 = vmatpush2.msra.mxu0 0.0
      %960 = vmatprep.subr.mxu0 0.0
      %961 = vmatpush2.msra.mxu0 0.0
      %962 = vmatprep.subr.mxu0 0.0
      %963 = vmatpush2.msra.mxu0 0.0
      %964 = vmatprep.subr.mxu0 0.0
      %965 = vmatpush2.msra.mxu0 0.0
      %966 = vmatprep.subr.mxu0 0.0
      %967 = vmatpush2.msra.mxu0 0.0
      %968 = vmatprep.subr.mxu0 0.0
      %969 = vmatpush2.msra.mxu0 0.0
      %970 = vmatprep.mubr.f32.mxu0 0.0
      %971 = vmatmul.mubr.f32.gmra.mxu0 %v530
      %v972 = vpop.f32.mrf.mxu0
      %v973 = vadd.f32 0.0, %v972
      %v974 = vpop.f32.mrf.mxu0
      %975 = vmatprep.mubr.f32.mxu0 0.0
      %976 = vmatmul.mubr.f32.gmra.mxu0 %v533
      %v977 = vpop.f32.mrf.mxu0
      %v978 = vadd.f32 0.0, %v977
      %v979 = vpop.f32.mrf.mxu0
      %980 = vmatprep.mubr.f32.mxu0 0.0
      %981 = vmatmul.mubr.f32.gmra.mxu0 %v536
      %v982 = vpop.f32.mrf.mxu0
      %v983 = vadd.f32 0.0, %v982
      %v984 = vpop.f32.mrf.mxu0
      %985 = vmatprep.mubr.f32.mxu0 0.0
      %986 = vmatmul.mubr.f32.gmra.mxu0 %v539
      %v987 = vpop.f32.mrf.mxu0
      %v988 = vadd.f32 0.0, %v987
      %v989 = vpop.f32.mrf.mxu0
      %990 = vdwg.mxu0
      %v991 = vmul.f32 %v973, %v675
      %v992 = vmul.f32 %v978, %v677
      %v993 = vmul.f32 %v983, %v679
      %v994 = vmul.f32 %v988, %v681
      %v995 = vadd.f32 %v893, %v991
      %v996 = vadd.f32 %v894, %v992
      %v997 = vadd.f32 %v895, %v993
      %v998 = vadd.f32 %v896, %v994
      %v999 = vmul.f32 %v995, %v691
      %v1000 = vmul.f32 %v996, %v693
      %v1001 = vmul.f32 %v997, %v695
      %v1002 = vmul.f32 %v998, %v697
      %1003 = vst.msk [vmem:[%s270] sm:$0xff] %vm284, %v999
      %1004 = vst.msk [vmem:[%s270 + $0x8] sm:$0xff] %vm284, %v1000
      %1005 = vst.msk [vmem:[%s270 + $0x10] sm:$0xff] %vm284, %v1001
      %1006 = vst.msk [vmem:[%s270 + $0x18] sm:$0xff] %vm284, %v1002
      %s1007 = smul.u32 4, %s16
      %p1008 = scmp.lt.s32.totalorder %s1007, 11
      %s1009 = scalar_select %p1008, %s1007, 11
      %s1010 = smul.addr %s1009, 8
      %s1011 = scalar_lea.vmem %s5, %s1010
      // Predicated region
      $region41: #{tpu_custom_call.1} parent=39 // pred_check
        %p1012 = pneg %p154
      $region42: #{tpu_custom_call.1} parent=39 // pred_check_branch
        %1014 = sbr.rel (%p1012) target = $region44
      $region43: #{tpu_custom_call.1} parent=39 // pred_region
        %s1015 = smul.u32 4, %s16
      $region44: #{tpu_custom_call.1} parent=39 // pred_fallthru
        _
    $region40: #{tpu_custom_call.1} parent=5 // pred_fallthru
      _
    %p1016 = scmp.le.s32.totalorder 2, %s11
    // Predicated region
    $region45: #{tpu_custom_call.1} parent=5 // pred_check
      %p1017 = pneg %p1016
    $region46: #{tpu_custom_call.1} parent=5 // pred_check_branch
      %1019 = sbr.rel (%p1017) target = $region48
    $region47: #{tpu_custom_call.1} parent=5 // pred_region
      %s1020 = ssub.s32 %s11, 2
      // Predicated region
      $region49: #{tpu_custom_call.1} parent=47 // pred_check
        %p1021 = pneg %p160
      $region50: #{tpu_custom_call.1} parent=47 // pred_check_branch
        %1023 = sbr.rel (%p1021) target = $region52
      $region51: #{tpu_custom_call.1} parent=47 // pred_region
        %s1024 = smul.u32 4, %s17
        %p1025 = scmp.lt.s32.totalorder %s1024, 11
        %s1026 = scalar_select %p1025, %s1024, 11
        %s1027 = smul.addr %s1026, 8
        %s1028 = scalar_lea.vmem %s5, %s1027
      $region52: #{tpu_custom_call.1} parent=47 // pred_fallthru
        _
    $region48: #{tpu_custom_call.1} parent=5 // pred_fallthru
      _
  $region6: #{tpu_custom_call.1} parent=0 // loop_footer
    %s15 = sadd.s32 1, %s11
  $region7: #{tpu_custom_call.1} parent=0 // loop_footer_branch
    %10 = sbr.rel target = $region3
  $region8: #{tpu_custom_call.1} parent=0 // loop_exit
    _

</llo_original>
